<compile_context>
chip_gen: v7x
topology: tpu7x:2x2x1
jax: 0.10.0
libtpu: 0.0.40
codegen_flags: <defaults>
</compile_context>

<pallas_src>
import jax
import jax.numpy as jnp
from jax import lax
from jax.experimental import pallas as pl
from jax.experimental.pallas import tpu as pltpu

_EPS = 1e-06

# Per-grid-step budget for the double-buffered in/out blocks plus in-kernel
# f32 temporaries.  Kept well under the smallest scoped VMEM default (16 MiB
# on v5e) and the explicit limit below, so the same tiling compiles on
# v5e / v6e / v7x (64 MiB physical VMEM).
_BLOCK_BUDGET_BYTES = 8 * 1024 * 1024
_VMEM_LIMIT_BYTES = 32 * 1024 * 1024


def _l2norm_kernel(x_ref, o_ref):
    # x_ref block: (Bn, C, tile_hw).  Reduce sum-of-squares over channels
    # (axis=1) in f32, then scale by the reciprocal square root.
    x = x_ref[...].astype(jnp.float32)
    sq_sum = jnp.sum(x * x, axis=1, keepdims=True)
    inv = lax.rsqrt(sq_sum + _EPS)  # EUP rsqrt + one VALU multiply (no divide)
    o_ref[...] = (x * inv).astype(o_ref.dtype)


def _choose_tiling(N, C, HW, itemsize):
    """Pick (images-per-block, lane tile, padded HW) under the VMEM budget."""
    # Bytes per lane column of one block: 2x (double-buffer) x (in + out)
    # plus ~2 f32 temporaries (cast + square) inside the kernel.
    per_lane = 2 * C * (itemsize + itemsize) + 2 * C * 4
    max_lanes = max(128, (_BLOCK_BUDGET_BYTES // per_lane) // 128 * 128)

    hw128 = ((HW + 127) // 128) * 128          # lane-dense spatial extent
    tile_hw = min(hw128, max_lanes)
    hw_pad = ((HW + tile_hw - 1) // tile_hw) * tile_hw

    bn = 1
    if tile_hw >= hw_pad:
        # Whole image fits in one tile: batch images per block to amortize the
        # ~0.35 us per-grid-step overhead, staying inside the lane budget.
        tile_hw = hw_pad
        max_bn = max(1, max_lanes // tile_hw)
        for d in range(min(N, max_bn), 0, -1):
            if N % d == 0:
                bn = d
                break
    return bn, tile_hw, hw_pad


def feature_l2_norm(feature):
    """L2-normalize `feature` over the channel (dim 1) axis, NCHW layout."""
    N, C, H, W = feature.shape
    HW = H * W
    x = feature.reshape(N, C, HW)

    bn, tile_hw, hw_pad = _choose_tiling(N, C, HW, jnp.dtype(feature.dtype).itemsize)

    if hw_pad != HW:
        # Pad the spatial axis so every block is lane-dense (no masked partial
        # stores); padded columns normalize to 0 and are sliced off below.
        x = jnp.pad(x, ((0, 0), (0, 0), (0, hw_pad - HW)))

    grid = (N // bn, hw_pad // tile_hw)

    out = pl.pallas_call(
        _l2norm_kernel,
        out_shape=jax.ShapeDtypeStruct((N, C, hw_pad), feature.dtype),
        grid_spec=pltpu.PrefetchScalarGridSpec(
            num_scalar_prefetch=0,
            grid=grid,
            in_specs=[pl.BlockSpec((bn, C, tile_hw), lambda n, t: (n, 0, t))],
            out_specs=pl.BlockSpec((bn, C, tile_hw), lambda n, t: (n, 0, t)),
        ),
        compiler_params=pltpu.CompilerParams(
            dimension_semantics=("parallel", "parallel"),
            vmem_limit_bytes=_VMEM_LIMIT_BYTES,
        ),
    )(x)

    if hw_pad != HW:
        out = out[:, :, :HW]
    return out.reshape(N, C, H, W)


if __name__ == "__main__":
    key = jax.random.PRNGKey(0)
    x = jax.random.normal(key, (2, 4, 16, 16), dtype=jnp.float32)

    y = feature_l2_norm(x)
    y = jax.block_until_ready(y)

    # Reference check (plain JAX, mirrors the PyTorch forward).
    ref = x / jnp.sqrt(jnp.sum(x * x, axis=1, keepdims=True) + _EPS)
    assert y.shape == x.shape and y.dtype == x.dtype
    assert jnp.allclose(y, ref, atol=1e-5, rtol=1e-5)

    # Also exercise a non-128-multiple spatial extent (padding path).
    x2 = jax.random.normal(jax.random.PRNGKey(1), (2, 4, 9, 13), dtype=jnp.float32)
    y2 = jax.block_until_ready(feature_l2_norm(x2))
    ref2 = x2 / jnp.sqrt(jnp.sum(x2 * x2, axis=1, keepdims=True) + _EPS)
    assert jnp.allclose(y2, ref2, atol=1e-5, rtol=1e-5)

    print("KERNEL_OK")
</pallas_src>

<mosaic_0001>
module attributes {stable_mosaic.version = 11 : i64} {
  func.func @_l2norm_kernel(%arg0: i32, %arg1: i32, %arg2: memref<2x4x256xf32, #tpu.memory_space<vmem>>, %arg3: memref<2x4x256xf32, #tpu.memory_space<vmem>>) attributes {dimension_semantics = [#tpu.dimension_semantics<parallel>, #tpu.dimension_semantics<parallel>], iteration_bounds = array<i64: 1, 1>, scalar_prefetch = 0 : i64, scratch_operands = 0 : i64, tpu.core_type = #tpu.core_type<tc>, window_params = [{transform_indices = @transform_0, window_bounds = array<i64: 2, 4, 256>}, {transform_indices = @transform_1, window_bounds = array<i64: 2, 4, 256>}]} {
    %c0 = arith.constant 0 : index
    %c0_0 = arith.constant 0 : index
    %c0_1 = arith.constant 0 : index
    %0 = vector.load %arg2[%c0, %c0_0, %c0_1] : memref<2x4x256xf32, #tpu.memory_space<vmem>>, vector<2x4x256xf32>
    %1 = arith.mulf %0, %0 : vector<2x4x256xf32>
    %cst = arith.constant dense<0.000000e+00> : vector<2x256xf32>
    %2 = vector.multi_reduction <add>, %1, %cst [1] : vector<2x4x256xf32> to vector<2x256xf32>
    %3 = vector.shape_cast %2 : vector<2x256xf32> to vector<2x1x256xf32>
    %cst_2 = arith.constant 9.99999997E-7 : f32
    %4 = vector.broadcast %cst_2 : f32 to vector<2x1x256xf32>
    %5 = arith.addf %3, %4 : vector<2x1x256xf32>
    %6 = math.rsqrt %5 : vector<2x1x256xf32>
    %7 = vector.broadcast %6 : vector<2x1x256xf32> to vector<2x4x256xf32>
    %8 = arith.mulf %0, %7 : vector<2x4x256xf32>
    %c0_3 = arith.constant 0 : index
    %c0_4 = arith.constant 0 : index
    %c0_5 = arith.constant 0 : index
    %9 = vector.load %arg3[%c0_3, %c0_4, %c0_5] : memref<2x4x256xf32, #tpu.memory_space<vmem>>, vector<2x4x256xf32>
    tpu.vector_store %arg3[%c0_3, %c0_4, %c0_5], %8 {strides = array<i32>} : memref<2x4x256xf32, #tpu.memory_space<vmem>>, vector<2x4x256xf32>,
    return
  }
  func.func @transform_0(%arg0: i32, %arg1: i32) -> (i32, i32, i32) {
    %c0_i32 = arith.constant 0 : i32
    %c0_i32_0 = arith.constant 0 : i32
    return %arg0, %c0_i32, %arg1 : i32, i32, i32
  }
  func.func @transform_1(%arg0: i32, %arg1: i32) -> (i32, i32, i32) {
    %c0_i32 = arith.constant 0 : i32
    %c0_i32_0 = arith.constant 0 : i32
    return %arg0, %c0_i32, %arg1 : i32, i32, i32
  }
}

</mosaic_0001>

<llo_original>
// kernel: tpu_custom_call.1
$region0: #{tpu_custom_call.1}
  #allocation0 [shape = 'u32[]', space=smem, size = 0x4, offset = 0x4, fixed_abs, tag = 'smem constant byte address 0x4 - core index']
  #allocation1 [shape = 'u32[144,128]{1,0:T(1,128)}', space=vmem, size = 0x12000, scoped, tag = 'internal scratch']
  %s0 = inlined_call_operand.hbm [shape: f32[2,4,256], index: 0, kind: input, shape index: {}]
  %s1 = inlined_call_operand.hbm [shape: f32[2,4,256], index: 1, kind: output, shape index: {}]
  %s2 = sld [smem:[#allocation0]]
  $region18: #{tpu_custom_call.1} parent=0
    _
  %s4 = ssub.s32 1, %s2
  %s5 = scalar_select 0, %s4, %s2
  $region1: #{tpu_custom_call.1} parent=0
    #allocation2 [shape = 'u8[8192]{0}', space=vmem, size = 0x2000, scoped, tag = 'input window, operand 0, single buffered']
    #allocation3 [shape = 's32[1]{0}', space=sflag, size = 0x4, scoped, tag = 'scoped memory for tpu_custom_call.1']
    #allocation4 [shape = 's32[1]{0}', space=sflag, size = 0x4, scoped, tag = 'scoped memory for tpu_custom_call.1']
    #allocation5 [shape = 'u8[8192]{0}', space=vmem, size = 0x2000, scoped, tag = 'output window, operand 0, single buffered']
    %6 = vsyncpa [#allocation3], 0
    %7 = vsyncpa [#allocation4], 0
    // Predicated region
    $region2: #{tpu_custom_call.1} parent=1 // pred_check
      _
    $region3: #{tpu_custom_call.1} parent=1 // pred_check_branch
      %9 = sbr.rel (0) target = $region5
    $region4: #{tpu_custom_call.1} parent=1 // pred_region
      %s11 = ssub.s32 256, 256
      %12 = vsyncadd [#allocation3], %s11
      %s13 = sshll.u32 [#allocation2], 4
      %s14 = int_to_ptr.vmem [resolvable:$true] %s13
      %19 = dma.hbm_to_vmem [thread:$0]  %s0, 256, %s14, [#allocation3], 128, 128, 8
    $region5: #{tpu_custom_call.1} parent=1 // pred_fallthru
      _
    // Predicated region
    $region6: #{tpu_custom_call.1} parent=1 // pred_check
      _
    $region7: #{tpu_custom_call.1} parent=1 // pred_check_branch
      %21 = sbr.rel (0) target = $region9
    $region8: #{tpu_custom_call.1} parent=1 // pred_region
      %22 = dma.done [#allocation3], 256
    $region9: #{tpu_custom_call.1} parent=1 // pred_fallthru
      _
    %v23 = vld [vmem:[#allocation2] sm:$0xff]
    %v24 = vld [vmem:[#allocation2 + $0x8] sm:$0xff]
    %v25 = vmul.f32 %v23, %v23
    %v26 = vmul.f32 %v24, %v24
    %v29 = vcombine.high %v25, %v25
    %v30 = vcombine.high %v26, %v26
    %vm33 = vcmask 1043456
    %v34 = vsel %vm33, %v25, 0.0
    %v35 = vrot.slane %v34, 4
    %v36 = vadd.f32 %v34, %v35
    %v37 = vrot.slane %v36, 2
    %v38 = vadd.f32 %v36, %v37
    %v39 = vrot.slane %v38, 1
    %v40 = vadd.f32 %v38, %v39
    %v41 = vsel %vm33, %v29, 0.0
    %v42 = vrot.slane %v41, 4
    %v43 = vadd.f32 %v41, %v42
    %v44 = vrot.slane %v43, 2
    %v45 = vadd.f32 %v43, %v44
    %v46 = vrot.slane %v45, 1
    %v47 = vadd.f32 %v45, %v46
    %v48 = vsel %vm33, %v26, 0.0
    %v49 = vrot.slane %v48, 4
    %v50 = vadd.f32 %v48, %v49
    %v51 = vrot.slane %v50, 2
    %v52 = vadd.f32 %v50, %v51
    %v53 = vrot.slane %v52, 1
    %v54 = vadd.f32 %v52, %v53
    %v55 = vsel %vm33, %v30, 0.0
    %v56 = vrot.slane %v55, 4
    %v57 = vadd.f32 %v55, %v56
    %v58 = vrot.slane %v57, 2
    %v59 = vadd.f32 %v57, %v58
    %v60 = vrot.slane %v59, 1
    %v61 = vadd.f32 %v59, %v60
    %v62 = vadd.f32 %v40, 1e-06
    %v63 = vadd.f32 %v47, 1e-06
    %v64 = vadd.f32 %v54, 1e-06
    %v65 = vadd.f32 %v61, 1e-06
    %v66 = vrsqrt.pop %v62
    %v67 = vrsqrt.pop %v63
    %v68 = vrsqrt.pop %v64
    %v69 = vrsqrt.pop %v65
    %v74 = vcombine.low %v66, %v67
    %v75 = vcombine.low %v68, %v69
    %v78 = vmul.f32 %v23, %v74
    %v79 = vmul.f32 %v24, %v75
    %80 = vst [vmem:[#allocation5] sm:$0xff] %v78
    %81 = vst [vmem:[#allocation5 + $0x8] sm:$0xff] %v79
    // Predicated region
    $region10: #{tpu_custom_call.1} parent=1 // pred_check
      _
    $region11: #{tpu_custom_call.1} parent=1 // pred_check_branch
      %83 = sbr.rel (0) target = $region13
    $region12: #{tpu_custom_call.1} parent=1 // pred_region
      %s85 = ssub.s32 256, 256
      %86 = vsyncadd [#allocation4], %s85
      %s87 = sshll.u32 [#allocation5], 4
      %s88 = int_to_ptr.vmem [resolvable:$true] %s87
      %93 = dma.vmem_to_hbm [thread:$0]  %s88, 256, %s1, [#allocation4], 128, 128, 8
    $region13: #{tpu_custom_call.1} parent=1 // pred_fallthru
      _
    // Predicated region
    $region14: #{tpu_custom_call.1} parent=1 // pred_check
      _
    $region15: #{tpu_custom_call.1} parent=1 // pred_check_branch
      %95 = sbr.rel (0) target = $region17
    $region16: #{tpu_custom_call.1} parent=1 // pred_region
      %96 = dma.done [#allocation4], 256
    $region17: #{tpu_custom_call.1} parent=1 // pred_fallthru
      _
    %97 = vsyncpa [#allocation3], 1
    %98 = vsyncpa [#allocation4], 1

</llo_original>
